<compile_context>
chip_gen: v5e
topology: v5e:2x2
jax: 0.10.0
libtpu: 0.0.40
codegen_flags: <defaults>
</compile_context>

<pallas_src>
import jax
import jax.numpy as jnp
from jax import lax
from jax.experimental import pallas as pl
from jax.experimental.pallas import tpu as pltpu


# ----------------------------- Pallas kernel ------------------------------ #
def _iac_mlp_kernel(obs_ref, act_ref, w1o_ref, w1a_ref, w1g_ref, b1_ref,
                    w2_ref, b2_ref, w3_ref, b3_ref, q_ref):
    """fc1 -> relu -> fc2 -> relu -> fc3 on one row tile.

    fc1 input is the concat [obs | actions_onehot | agent one-hot]; the agent
    one-hot block is generated in-kernel from the row index (no HBM traffic).
    Streamed f32 activations are cast to bf16 just before the MXU; all
    accumulation / bias / relu stays f32.
    """
    tm = obs_ref.shape[0]
    n_agents = w1g_ref.shape[0]

    h1 = jnp.dot(obs_ref[...].astype(jnp.bfloat16), w1o_ref[...],
                 preferred_element_type=jnp.float32)
    h1 = h1 + jnp.dot(act_ref[...].astype(jnp.bfloat16), w1a_ref[...],
                      preferred_element_type=jnp.float32)

    # Agent-id one-hot block of the concatenated input, built from the global
    # row index: row r belongs to agent (r % n_agents) under the row-major
    # (bs, max_t, n_agents) flatten of _build_inputs.
    row0 = pl.program_id(0) * tm
    r = lax.broadcasted_iota(jnp.int32, (tm, n_agents), 0)
    c = lax.broadcasted_iota(jnp.int32, (tm, n_agents), 1)
    agent_oh = (((row0 + r) % n_agents) == c).astype(jnp.bfloat16)
    h1 = h1 + jnp.dot(agent_oh, w1g_ref[...], preferred_element_type=jnp.float32)

    h1 = jnp.maximum(h1 + b1_ref[...], 0.0)

    h2 = jnp.dot(h1.astype(jnp.bfloat16), w2_ref[...],
                 preferred_element_type=jnp.float32)
    h2 = jnp.maximum(h2 + b2_ref[...], 0.0)

    q = jnp.dot(h2.astype(jnp.bfloat16), w3_ref[...],
                preferred_element_type=jnp.float32)
    q_ref[...] = (q + b3_ref[...]).astype(q_ref.dtype)


def _round_up(x, m):
    return ((x + m - 1) // m) * m


# ----------------------------- module wrapper ------------------------------ #
def iac_critic_forward(obs, actions_onehot, params, n_agents, n_actions,
                       tile_rows=2048):
    """Pallas forward of IACCritic (t=None path of _build_inputs).

    obs:            (bs, max_t, n_agents, obs_dim)
    actions_onehot: (bs, max_t, n_agents, n_actions)
    returns:        (bs, max_t, n_agents, n_actions) float32
    """
    w1, b1, w2, b2, w3, b3 = params
    bs, max_t, _, obs_dim = obs.shape
    hidden = w1.shape[1]
    n_rows = bs * max_t * n_agents

    # Split W1 by the concat layout of _build_inputs: [obs | actions | agent_id].
    w1_obs = w1[:obs_dim]
    w1_act = w1[obs_dim:obs_dim + n_actions]
    w1_agt = w1[obs_dim + n_actions:]

    # Row tile: multiple of 8 (f32 sublane). Default 2048 rows amortizes the
    # per-grid-step overhead (good for v5e/v6e single-TC); capped so the grid
    # has >= 2 steps whenever possible so v7x's two TensorCores both get work.
    base = 8
    tm = min(tile_rows, _round_up(n_rows, base))
    if n_rows >= 2 * base:
        tm = min(tm, _round_up(pl.cdiv(n_rows, 2), base))
    tm = max(tm, base)
    n_pad = _round_up(n_rows, tm)

    # Streamed activations stay f32 (bf16 cast happens in-kernel); pad rows to
    # whole tiles only when needed.
    obs2d = obs.reshape(n_rows, obs_dim).astype(jnp.float32)
    act2d = actions_onehot.reshape(n_rows, n_actions).astype(jnp.float32)
    if n_pad != n_rows:
        obs2d = jnp.pad(obs2d, ((0, n_pad - n_rows), (0, 0)))
        act2d = jnp.pad(act2d, ((0, n_pad - n_rows), (0, 0)))

    # Narrow output: pad n_actions only up to a sublane-friendly multiple of 8
    # (the f32 writeback dominates HBM traffic; 128-lane padding would inflate
    # it ~21x for small n_actions).
    out_pad = _round_up(n_actions, 8)
    w3_p = jnp.pad(w3, ((0, 0), (0, out_pad - n_actions)))
    b3_p = jnp.pad(b3.reshape(1, n_actions), ((0, 0), (0, out_pad - n_actions)))

    # bf16 resident matmul operands; biases stay f32.
    w1_obs_b = w1_obs.astype(jnp.bfloat16)
    w1_act_b = w1_act.astype(jnp.bfloat16)
    w1_agt_b = w1_agt.astype(jnp.bfloat16)
    b1_f = b1.reshape(1, hidden).astype(jnp.float32)
    w2_b = w2.astype(jnp.bfloat16)
    b2_f = b2.reshape(1, hidden).astype(jnp.float32)
    w3_b = w3_p.astype(jnp.bfloat16)
    b3_f = b3_p.astype(jnp.float32)

    def resident(shape):
        # Full-array block, constant index_map -> stays in VMEM across steps.
        return pl.BlockSpec(shape, lambda i: (0, 0))

    grid = (n_pad // tm,)
    input_shape = obs_dim + n_actions + n_agents

    weight_bytes = (w1_obs_b.size + w1_act_b.size + w1_agt_b.size + w2_b.size
                    + w3_b.size) * 2 + (b1_f.size + b2_f.size + b3_f.size) * 4
    cost = pl.CostEstimate(
        flops=2 * n_rows * (input_shape * hidden + hidden * hidden
                            + hidden * n_actions),
        transcendentals=0,
        bytes_accessed=(obs2d.size + act2d.size + n_pad * out_pad) * 4
                       + weight_bytes,
    )

    q_pad = pl.pallas_call(
        _iac_mlp_kernel,
        out_shape=jax.ShapeDtypeStruct((n_pad, out_pad), jnp.float32),
        grid=grid,
        in_specs=[
            pl.BlockSpec((tm, obs_dim), lambda i: (i, 0)),    # obs tile (streamed)
            pl.BlockSpec((tm, n_actions), lambda i: (i, 0)),  # action tile (streamed)
            resident((obs_dim, hidden)),                      # W1[obs block]
            resident((n_actions, hidden)),                    # W1[action block]
            resident((n_agents, hidden)),                     # W1[agent-id block]
            resident((1, hidden)),                            # b1
            resident((hidden, hidden)),                       # W2
            resident((1, hidden)),                            # b2
            resident((hidden, out_pad)),                      # W3 (8-padded cols)
            resident((1, out_pad)),                           # b3 (8-padded cols)
        ],
        out_specs=pl.BlockSpec((tm, out_pad), lambda i: (i, 0)),
        compiler_params=pltpu.CompilerParams(
            dimension_semantics=("parallel",)),
        cost_estimate=cost,
    )(obs2d, act2d, w1_obs_b, w1_act_b, w1_agt_b, b1_f, w2_b, b2_f, w3_b, b3_f)

    q = q_pad[:n_rows, :n_actions]
    return q.reshape(bs, max_t, n_agents, n_actions)


def init_params(key, input_shape, n_actions, hidden=128):
    """Deterministic init matching nn.Linear default (U[-1/sqrt(fan_in), ...])."""
    ks = jax.random.split(key, 6)

    def linear(kw, kb, fan_in, fan_out):
        bound = 1.0 / jnp.sqrt(fan_in)
        w = jax.random.uniform(kw, (fan_in, fan_out), jnp.float32, -bound, bound)
        b = jax.random.uniform(kb, (1, fan_out), jnp.float32, -bound, bound)
        return w, b

    w1, b1 = linear(ks[0], ks[1], input_shape, hidden)
    w2, b2 = linear(ks[2], ks[3], hidden, hidden)
    w3, b3 = linear(ks[4], ks[5], hidden, n_actions)
    return (w1, b1, w2, b2, w3, b3)


# ----------------------------- reference (f32) ----------------------------- #
def _reference(obs, actions_onehot, params, n_agents):
    """Pure-JAX f32 replica of IACCritic.forward (t=None)."""
    w1, b1, w2, b2, w3, b3 = params
    bs, max_t = obs.shape[0], obs.shape[1]
    agent_ids = jnp.broadcast_to(jnp.eye(n_agents, dtype=obs.dtype)[None, None],
                                 (bs, max_t, n_agents, n_agents))
    x = jnp.concatenate(
        [obs.reshape(bs, max_t, n_agents, -1),
         actions_onehot.reshape(bs, max_t, n_agents, -1),
         agent_ids], axis=-1)
    h1 = jax.nn.relu(x @ w1 + b1[0])
    h2 = jax.nn.relu(h1 @ w2 + b2[0])
    return h2 @ w3 + b3[0]


if __name__ == "__main__":
    # Small, scheme-consistent shapes.
    bs, max_t, n_agents, obs_dim, n_actions = 2, 8, 4, 16, 6
    input_shape = obs_dim + n_actions + n_agents  # obs + actions_onehot + agent id

    key = jax.random.PRNGKey(0)
    k_obs, k_act, k_par = jax.random.split(key, 3)

    obs = jax.random.normal(k_obs, (bs, max_t, n_agents, obs_dim), jnp.float32)
    act_idx = jax.random.randint(k_act, (bs, max_t, n_agents), 0, n_actions)
    actions_onehot = jax.nn.one_hot(act_idx, n_actions, dtype=jnp.float32)

    params = init_params(k_par, input_shape, n_actions)

    # TODO(synk): the EpisodeBatch `t` slicing path is handled by the caller
    # slicing obs/actions_onehot before this wrapper (max_t=1), not in-kernel.
    q = iac_critic_forward(obs, actions_onehot, params, n_agents, n_actions)
    q = jax.block_until_ready(q)

    q_ref = _reference(obs, actions_onehot, params, n_agents)
    assert q.shape == (bs, max_t, n_agents, n_actions)
    # bf16 matmul operands vs f32 reference -> loosen tolerance accordingly.
    assert jnp.allclose(q, q_ref, atol=3e-2, rtol=3e-2), "mismatch vs reference"

    print("KERNEL_OK")
</pallas_src>

<mosaic_0001>
module attributes {stable_mosaic.version = 11 : i64} {
  func.func @_iac_mlp_kernel(%arg0: i32, %arg1: memref<32x16xf32, #tpu.memory_space<vmem>>, %arg2: memref<32x6xf32, #tpu.memory_space<vmem>>, %arg3: memref<16x128xbf16, #tpu.memory_space<vmem>>, %arg4: memref<6x128xbf16, #tpu.memory_space<vmem>>, %arg5: memref<4x128xbf16, #tpu.memory_space<vmem>>, %arg6: memref<1x128xf32, #tpu.memory_space<vmem>>, %arg7: memref<128x128xbf16, #tpu.memory_space<vmem>>, %arg8: memref<1x128xf32, #tpu.memory_space<vmem>>, %arg9: memref<128x8xbf16, #tpu.memory_space<vmem>>, %arg10: memref<1x8xf32, #tpu.memory_space<vmem>>, %arg11: memref<32x8xf32, #tpu.memory_space<vmem>>) attributes {dimension_semantics = [#tpu.dimension_semantics<parallel>], iteration_bounds = array<i64: 2>, scalar_prefetch = 0 : i64, scratch_operands = 0 : i64, tpu.core_type = #tpu.core_type<tc>, window_params = [{transform_indices = @transform_0, window_bounds = array<i64: 32, 16>}, {transform_indices = @transform_1, window_bounds = array<i64: 32, 6>}, {pipeline_mode = #tpu.pipeline_mode<synchronous>, transform_indices = @transform_2, window_bounds = array<i64: 16, 128>}, {pipeline_mode = #tpu.pipeline_mode<synchronous>, transform_indices = @transform_3, window_bounds = array<i64: 6, 128>}, {pipeline_mode = #tpu.pipeline_mode<synchronous>, transform_indices = @transform_4, window_bounds = array<i64: 4, 128>}, {pipeline_mode = #tpu.pipeline_mode<synchronous>, transform_indices = @transform_5, window_bounds = array<i64: 1, 128>}, {pipeline_mode = #tpu.pipeline_mode<synchronous>, transform_indices = @transform_6, window_bounds = array<i64: 128, 128>}, {pipeline_mode = #tpu.pipeline_mode<synchronous>, transform_indices = @transform_7, window_bounds = array<i64: 1, 128>}, {pipeline_mode = #tpu.pipeline_mode<synchronous>, transform_indices = @transform_8, window_bounds = array<i64: 128, 8>}, {pipeline_mode = #tpu.pipeline_mode<synchronous>, transform_indices = @transform_9, window_bounds = array<i64: 1, 8>}, {transform_indices = @transform_10, window_bounds = array<i64: 32, 8>}]} {
    %c0 = arith.constant 0 : index
    %c0_0 = arith.constant 0 : index
    %0 = vector.load %arg1[%c0, %c0_0] : memref<32x16xf32, #tpu.memory_space<vmem>>, vector<32x16xf32>
    %1 = arith.truncf %0 : vector<32x16xf32> to vector<32x16xbf16>
    %c0_1 = arith.constant 0 : index
    %c0_2 = arith.constant 0 : index
    %2 = vector.load %arg3[%c0_1, %c0_2] : memref<16x128xbf16, #tpu.memory_space<vmem>>, vector<16x128xbf16>
    %cst = arith.constant dense<0.000000e+00> : vector<32x128xf32>
    %3 = tpu.matmul %1, %2, %cst {dimension_numbers = #tpu.dot_dimension_numbers<[1], [0], [0], [1], [0, 0, 1, 1], [], []>} : vector<32x16xbf16>, vector<16x128xbf16>, vector<32x128xf32> -> vector<32x128xf32>
    %c0_3 = arith.constant 0 : index
    %c0_4 = arith.constant 0 : index
    %4 = vector.load %arg2[%c0_3, %c0_4] : memref<32x6xf32, #tpu.memory_space<vmem>>, vector<32x6xf32>
    %5 = arith.truncf %4 : vector<32x6xf32> to vector<32x6xbf16>
    %c0_5 = arith.constant 0 : index
    %c0_6 = arith.constant 0 : index
    %6 = vector.load %arg4[%c0_5, %c0_6] : memref<6x128xbf16, #tpu.memory_space<vmem>>, vector<6x128xbf16>
    %cst_7 = arith.constant dense<0.000000e+00> : vector<32x128xf32>
    %7 = tpu.matmul %5, %6, %cst_7 {dimension_numbers = #tpu.dot_dimension_numbers<[1], [0], [0], [1], [0, 0, 1, 1], [], []>} : vector<32x6xbf16>, vector<6x128xbf16>, vector<32x128xf32> -> vector<32x128xf32>
    %8 = arith.addf %3, %7 : vector<32x128xf32>
    %c32_i32 = arith.constant 32 : i32
    %9 = arith.muli %arg0, %c32_i32 : i32
    %10 = tpu.iota {dimensions = array<i32: 0>} : vector<32x4xi32>
    %11 = tpu.iota {dimensions = array<i32: 1>} : vector<32x4xi32>
    %12 = vector.broadcast %9 : i32 to vector<32x4xi32>
    %13 = arith.addi %12, %10 : vector<32x4xi32>
    %c4_i32 = arith.constant 4 : i32
    %c0_i32 = arith.constant 0 : i32
    %14 = arith.cmpi eq, %c4_i32, %c0_i32 : i32
    %c1_i32 = arith.constant 1 : i32
    %15 = arith.select %14, %c1_i32, %c4_i32 : i32
    %16 = vector.broadcast %15 : i32 to vector<32x4xi32>
    %17 = arith.remsi %13, %16 : vector<32x4xi32>
    %c0_i32_8 = arith.constant 0 : i32
    %18 = vector.broadcast %c0_i32_8 : i32 to vector<32x4xi32>
    %19 = arith.cmpi ne, %17, %18 : vector<32x4xi32>
    %c0_i32_9 = arith.constant 0 : i32
    %20 = vector.broadcast %c0_i32_9 : i32 to vector<32x4xi32>
    %21 = arith.cmpi slt, %17, %20 : vector<32x4xi32>
    %c0_i32_10 = arith.constant 0 : i32
    %22 = arith.cmpi slt, %15, %c0_i32_10 : i32
    %23 = vector.broadcast %22 : i1 to vector<32x4xi1>
    %24 = vector.broadcast %23 : vector<32x4xi1> to vector<32x4xi1>
    %25 = arith.xori %21, %24 : vector<32x4xi1>
    %26 = arith.andi %25, %19 : vector<32x4xi1>
    %27 = vector.broadcast %15 : i32 to vector<32x4xi32>
    %28 = arith.addi %17, %27 : vector<32x4xi32>
    %29 = arith.select %26, %28, %17 : vector<32x4xi1>, vector<32x4xi32>
    %30 = arith.cmpi eq, %29, %11 : vector<32x4xi32>
    %31 = arith.extui %30 : vector<32x4xi1> to vector<32x4xi32>
    %32 = arith.sitofp %31 : vector<32x4xi32> to vector<32x4xf32>
    %33 = arith.truncf %32 : vector<32x4xf32> to vector<32x4xbf16>
    %c0_11 = arith.constant 0 : index
    %c0_12 = arith.constant 0 : index
    %34 = vector.load %arg5[%c0_11, %c0_12] : memref<4x128xbf16, #tpu.memory_space<vmem>>, vector<4x128xbf16>
    %cst_13 = arith.constant dense<0.000000e+00> : vector<32x128xf32>
    %35 = tpu.matmul %33, %34, %cst_13 {dimension_numbers = #tpu.dot_dimension_numbers<[1], [0], [0], [1], [0, 0, 1, 1], [], []>} : vector<32x4xbf16>, vector<4x128xbf16>, vector<32x128xf32> -> vector<32x128xf32>
    %36 = arith.addf %8, %35 : vector<32x128xf32>
    %c0_14 = arith.constant 0 : index
    %c0_15 = arith.constant 0 : index
    %37 = vector.load %arg6[%c0_14, %c0_15] : memref<1x128xf32, #tpu.memory_space<vmem>>, vector<1x128xf32>
    %38 = vector.broadcast %37 : vector<1x128xf32> to vector<32x128xf32>
    %39 = arith.addf %36, %38 : vector<32x128xf32>
    %cst_16 = arith.constant 0.000000e+00 : f32
    %40 = vector.broadcast %cst_16 : f32 to vector<32x128xf32>
    %41 = arith.maximumf %39, %40 : vector<32x128xf32>
    %42 = arith.truncf %41 : vector<32x128xf32> to vector<32x128xbf16>
    %c0_17 = arith.constant 0 : index
    %c0_18 = arith.constant 0 : index
    %43 = vector.load %arg7[%c0_17, %c0_18] : memref<128x128xbf16, #tpu.memory_space<vmem>>, vector<128x128xbf16>
    %cst_19 = arith.constant dense<0.000000e+00> : vector<32x128xf32>
    %44 = tpu.matmul %42, %43, %cst_19 {dimension_numbers = #tpu.dot_dimension_numbers<[1], [0], [0], [1], [0, 0, 1, 1], [], []>} : vector<32x128xbf16>, vector<128x128xbf16>, vector<32x128xf32> -> vector<32x128xf32>
    %c0_20 = arith.constant 0 : index
    %c0_21 = arith.constant 0 : index
    %45 = vector.load %arg8[%c0_20, %c0_21] : memref<1x128xf32, #tpu.memory_space<vmem>>, vector<1x128xf32>
    %46 = vector.broadcast %45 : vector<1x128xf32> to vector<32x128xf32>
    %47 = arith.addf %44, %46 : vector<32x128xf32>
    %cst_22 = arith.constant 0.000000e+00 : f32
    %48 = vector.broadcast %cst_22 : f32 to vector<32x128xf32>
    %49 = arith.maximumf %47, %48 : vector<32x128xf32>
    %50 = arith.truncf %49 : vector<32x128xf32> to vector<32x128xbf16>
    %c0_23 = arith.constant 0 : index
    %c0_24 = arith.constant 0 : index
    %51 = vector.load %arg9[%c0_23, %c0_24] : memref<128x8xbf16, #tpu.memory_space<vmem>>, vector<128x8xbf16>
    %cst_25 = arith.constant dense<0.000000e+00> : vector<32x8xf32>
    %52 = tpu.matmul %50, %51, %cst_25 {dimension_numbers = #tpu.dot_dimension_numbers<[1], [0], [0], [1], [0, 0, 1, 1], [], []>} : vector<32x128xbf16>, vector<128x8xbf16>, vector<32x8xf32> -> vector<32x8xf32>
    %c0_26 = arith.constant 0 : index
    %c0_27 = arith.constant 0 : index
    %53 = vector.load %arg10[%c0_26, %c0_27] : memref<1x8xf32, #tpu.memory_space<vmem>>, vector<1x8xf32>
    %54 = vector.broadcast %53 : vector<1x8xf32> to vector<32x8xf32>
    %55 = arith.addf %52, %54 : vector<32x8xf32>
    %c0_28 = arith.constant 0 : index
    %c0_29 = arith.constant 0 : index
    %56 = vector.load %arg11[%c0_28, %c0_29] : memref<32x8xf32, #tpu.memory_space<vmem>>, vector<32x8xf32>
    tpu.vector_store %arg11[%c0_28, %c0_29], %55 {strides = array<i32>} : memref<32x8xf32, #tpu.memory_space<vmem>>, vector<32x8xf32>,
    return
  }
  func.func @transform_0(%arg0: i32) -> (i32, i32) {
    %c0_i32 = arith.constant 0 : i32
    %c0_i32_0 = arith.constant 0 : i32
    return %arg0, %c0_i32 : i32, i32
  }
  func.func @transform_1(%arg0: i32) -> (i32, i32) {
    %c0_i32 = arith.constant 0 : i32
    %c0_i32_0 = arith.constant 0 : i32
    return %arg0, %c0_i32 : i32, i32
  }
  func.func @transform_2(%arg0: i32) -> (i32, i32) {
    %c0_i32 = arith.constant 0 : i32
    %c0_i32_0 = arith.constant 0 : i32
    %c0_i32_1 = arith.constant 0 : i32
    return %c0_i32, %c0_i32_0 : i32, i32
  }
  func.func @transform_3(%arg0: i32) -> (i32, i32) {
    %c0_i32 = arith.constant 0 : i32
    %c0_i32_0 = arith.constant 0 : i32
    %c0_i32_1 = arith.constant 0 : i32
    return %c0_i32, %c0_i32_0 : i32, i32
  }
  func.func @transform_4(%arg0: i32) -> (i32, i32) {
    %c0_i32 = arith.constant 0 : i32
    %c0_i32_0 = arith.constant 0 : i32
    %c0_i32_1 = arith.constant 0 : i32
    return %c0_i32, %c0_i32_0 : i32, i32
  }
  func.func @transform_5(%arg0: i32) -> (i32, i32) {
    %c0_i32 = arith.constant 0 : i32
    %c0_i32_0 = arith.constant 0 : i32
    %c0_i32_1 = arith.constant 0 : i32
    return %c0_i32, %c0_i32_0 : i32, i32
  }
  func.func @transform_6(%arg0: i32) -> (i32, i32) {
    %c0_i32 = arith.constant 0 : i32
    %c0_i32_0 = arith.constant 0 : i32
    %c0_i32_1 = arith.constant 0 : i32
    return %c0_i32, %c0_i32_0 : i32, i32
  }
  func.func @transform_7(%arg0: i32) -> (i32, i32) {
    %c0_i32 = arith.constant 0 : i32
    %c0_i32_0 = arith.constant 0 : i32
    %c0_i32_1 = arith.constant 0 : i32
    return %c0_i32, %c0_i32_0 : i32, i32
  }
  func.func @transform_8(%arg0: i32) -> (i32, i32) {
    %c0_i32 = arith.constant 0 : i32
    %c0_i32_0 = arith.constant 0 : i32
    %c0_i32_1 = arith.constant 0 : i32
    return %c0_i32, %c0_i32_0 : i32, i32
  }
  func.func @transform_9(%arg0: i32) -> (i32, i32) {
    %c0_i32 = arith.constant 0 : i32
    %c0_i32_0 = arith.constant 0 : i32
    %c0_i32_1 = arith.constant 0 : i32
    return %c0_i32, %c0_i32_0 : i32, i32
  }
  func.func @transform_10(%arg0: i32) -> (i32, i32) {
    %c0_i32 = arith.constant 0 : i32
    %c0_i32_0 = arith.constant 0 : i32
    return %arg0, %c0_i32 : i32, i32
  }
}

</mosaic_0001>

<llo_original>
// kernel: tpu_custom_call.1
$region0: #{tpu_custom_call.1}
  #allocation0 [shape = 'u32[]', space=smem, size = 0x4, offset = 0x4, fixed_abs, tag = 'smem constant byte address 0x4 - core index']
  #allocation1 [shape = 'u32[72,128]{1,0:T(1,128)}', space=vmem, size = 0x9000, scoped, tag = 'internal scratch']
  %s0 = inlined_call_operand.vmem [shape: f32[64,16], index: 0, kind: input, shape index: {}]
  %s1 = inlined_call_operand.vmem [shape: f32[64,6], index: 1, kind: input, shape index: {}]
  %s2 = inlined_call_operand.vmem [shape: bf16[16,128], index: 2, kind: input, shape index: {}]
  %s3 = inlined_call_operand.vmem [shape: bf16[6,128], index: 3, kind: input, shape index: {}]
  %s4 = inlined_call_operand.vmem [shape: bf16[4,128], index: 4, kind: input, shape index: {}]
  %s5 = inlined_call_operand.vmem [shape: f32[1,128], index: 5, kind: input, shape index: {}]
  %s6 = inlined_call_operand.vmem [shape: bf16[128,128], index: 6, kind: input, shape index: {}]
  %s7 = inlined_call_operand.vmem [shape: f32[1,128], index: 7, kind: input, shape index: {}]
  %s8 = inlined_call_operand.vmem [shape: bf16[128,8], index: 8, kind: input, shape index: {}]
  %s9 = inlined_call_operand.vmem [shape: f32[1,8], index: 9, kind: input, shape index: {}]
  %s10 = inlined_call_operand.vmem [shape: f32[64,8], index: 10, kind: output, shape index: {}]
  %s11 = sld [smem:[#allocation0]]
  $region73: #{tpu_custom_call.1} parent=0
    _
  %s13 = ssub.s32 1, %s11
  %s14 = scalar_select 0, %s13, %s11
  loop: start=0, step=1, limit=4
  $region2: #{tpu_custom_call.1} parent=0 // loop_pre_header
    _
  $region3: #{tpu_custom_call.1} parent=0 // loop_header
    %s16 = sphi 0, %s20
    %p17 = scmp.ge.s32.totalorder %s16, 4
    %s26 = sphi 0, %s28
    %s29 = sphi 0, %s26
    %s30 = sphi 0, %s29
    %s46 = sphi 0, %s30
    %s52 = sphi 0, %s54
    %s55 = sphi 0, %s52
    %s56 = sphi 0, %s55
    %s72 = sphi 0, %s56
    %s76 = sphi 0, %s76
    %s78 = sphi 0, %s76
    %s79 = sphi 0, %s78
    %s93 = sphi 0, %s79
    %s97 = sphi 0, %s97
    %s99 = sphi 0, %s97
    %s100 = sphi 0, %s99
    %s114 = sphi 0, %s100
    %s118 = sphi 0, %s118
    %s120 = sphi 0, %s118
    %s121 = sphi 0, %s120
    %s135 = sphi 0, %s121
    %s139 = sphi 0, %s139
    %s141 = sphi 0, %s139
    %s142 = sphi 0, %s141
    %s156 = sphi 0, %s142
    %s160 = sphi 0, %s160
    %s162 = sphi 0, %s160
    %s163 = sphi 0, %s162
    %s177 = sphi 0, %s163
    %s181 = sphi 0, %s181
    %s183 = sphi 0, %s181
    %s184 = sphi 0, %s183
    %s198 = sphi 0, %s184
    %s202 = sphi 0, %s202
    %s204 = sphi 0, %s202
    %s205 = sphi 0, %s204
    %s219 = sphi 0, %s205
    %s223 = sphi 0, %s223
    %s225 = sphi 0, %s223
    %s226 = sphi 0, %s225
    %s240 = sphi 0, %s226
    %s246 = sphi 0, %s248
    %s249 = sphi 0, %s246
    %s250 = sphi 0, %s249
    %s266 = sphi 0, %s250
  $region4: #{tpu_custom_call.1} parent=0 // loop_header_branch
    %19 = sbr.rel (%p17) target = $region8
  $region5: #{tpu_custom_call.1} parent=0 // loop_body
    %s21 = ssub.s32 %s16, 1
    %s22 = ssub.s32 %s16, 2
    %s23 = sadd.s32 %s16, 1
    %s24 = ssub.s32 %s16, %s23
    %p25 = scmp.eq.s32.totalorder %s24, 0
    %s27 = sadd.s32 %s26, 1
    %s28 = scalar_select %p25, %s26, %s27
    %p31 = pneg %p25
    %p32 = scmp.eq.s32.totalorder %s16, 1
    %p33 = por %p31, %p32
    %p34 = scmp.ne.s32.totalorder %s26, %s29
    %p35 = scmp.eq.s32.totalorder %s16, 0
    %p36 = por %p34, %p35
    %p37 = scmp.ne.s32.totalorder %s26, %s29
    %p38 = scmp.eq.s32.totalorder %s21, 1
    %p39 = por %p37, %p38
    %p40 = scmp.ne.s32.totalorder %s29, %s30
    %p41 = scmp.eq.s32.totalorder %s21, 0
    %p42 = por %p40, %p41
    %p43 = scmp.ne.s32.totalorder %s29, %s30
    %p44 = scmp.eq.s32.totalorder %s22, 1
    %p45 = por %p43, %p44
    %p47 = scmp.ne.s32.totalorder %s30, %s46
    %p48 = scmp.eq.s32.totalorder %s22, 0
    %p49 = por %p47, %p48
    %s50 = ssub.s32 %s16, %s23
    %p51 = scmp.eq.s32.totalorder %s50, 0
    %s53 = sadd.s32 %s52, 1
    %s54 = scalar_select %p51, %s52, %s53
    %p57 = pneg %p51
    %p58 = scmp.eq.s32.totalorder %s16, 1
    %p59 = por %p57, %p58
    %p60 = scmp.ne.s32.totalorder %s52, %s55
    %p61 = scmp.eq.s32.totalorder %s16, 0
    %p62 = por %p60, %p61
    %p63 = scmp.ne.s32.totalorder %s52, %s55
    %p64 = scmp.eq.s32.totalorder %s21, 1
    %p65 = por %p63, %p64
    %p66 = scmp.ne.s32.totalorder %s55, %s56
    %p67 = scmp.eq.s32.totalorder %s21, 0
    %p68 = por %p66, %p67
    %p69 = scmp.ne.s32.totalorder %s55, %s56
    %p70 = scmp.eq.s32.totalorder %s22, 1
    %p71 = por %p69, %p70
    %p73 = scmp.ne.s32.totalorder %s56, %s72
    %p74 = scmp.eq.s32.totalorder %s22, 0
    %p75 = por %p73, %p74
    %s77 = sadd.s32 %s76, 1
    %p80 = scmp.eq.s32.totalorder %s16, 1
    %p81 = scmp.ne.s32.totalorder %s76, %s78
    %p82 = scmp.eq.s32.totalorder %s16, 0
    %p83 = por %p81, %p82
    %p84 = scmp.ne.s32.totalorder %s76, %s78
    %p85 = scmp.eq.s32.totalorder %s21, 1
    %p86 = por %p84, %p85
    %p87 = scmp.ne.s32.totalorder %s78, %s79
    %p88 = scmp.eq.s32.totalorder %s21, 0
    %p89 = por %p87, %p88
    %p90 = scmp.ne.s32.totalorder %s78, %s79
    %p91 = scmp.eq.s32.totalorder %s22, 1
    %p92 = por %p90, %p91
    %p94 = scmp.ne.s32.totalorder %s79, %s93
    %p95 = scmp.eq.s32.totalorder %s22, 0
    %p96 = por %p94, %p95
    %s98 = sadd.s32 %s97, 1
    %p101 = scmp.eq.s32.totalorder %s16, 1
    %p102 = scmp.ne.s32.totalorder %s97, %s99
    %p103 = scmp.eq.s32.totalorder %s16, 0
    %p104 = por %p102, %p103
    %p105 = scmp.ne.s32.totalorder %s97, %s99
    %p106 = scmp.eq.s32.totalorder %s21, 1
    %p107 = por %p105, %p106
    %p108 = scmp.ne.s32.totalorder %s99, %s100
    %p109 = scmp.eq.s32.totalorder %s21, 0
    %p110 = por %p108, %p109
    %p111 = scmp.ne.s32.totalorder %s99, %s100
    %p112 = scmp.eq.s32.totalorder %s22, 1
    %p113 = por %p111, %p112
    %p115 = scmp.ne.s32.totalorder %s100, %s114
    %p116 = scmp.eq.s32.totalorder %s22, 0
    %p117 = por %p115, %p116
    %s119 = sadd.s32 %s118, 1
    %p122 = scmp.eq.s32.totalorder %s16, 1
    %p123 = scmp.ne.s32.totalorder %s118, %s120
    %p124 = scmp.eq.s32.totalorder %s16, 0
    %p125 = por %p123, %p124
    %p126 = scmp.ne.s32.totalorder %s118, %s120
    %p127 = scmp.eq.s32.totalorder %s21, 1
    %p128 = por %p126, %p127
    %p129 = scmp.ne.s32.totalorder %s120, %s121
    %p130 = scmp.eq.s32.totalorder %s21, 0
    %p131 = por %p129, %p130
    %p132 = scmp.ne.s32.totalorder %s120, %s121
    %p133 = scmp.eq.s32.totalorder %s22, 1
    %p134 = por %p132, %p133
    %p136 = scmp.ne.s32.totalorder %s121, %s135
    %p137 = scmp.eq.s32.totalorder %s22, 0
    %p138 = por %p136, %p137
    %s140 = sadd.s32 %s139, 1
    %p143 = scmp.eq.s32.totalorder %s16, 1
    %p144 = scmp.ne.s32.totalorder %s139, %s141
    %p145 = scmp.eq.s32.totalorder %s16, 0
    %p146 = por %p144, %p145
    %p147 = scmp.ne.s32.totalorder %s139, %s141
    %p148 = scmp.eq.s32.totalorder %s21, 1
    %p149 = por %p147, %p148
    %p150 = scmp.ne.s32.totalorder %s141, %s142
    %p151 = scmp.eq.s32.totalorder %s21, 0
    %p152 = por %p150, %p151
    %p153 = scmp.ne.s32.totalorder %s141, %s142
    %p154 = scmp.eq.s32.totalorder %s22, 1
    %p155 = por %p153, %p154
    %p157 = scmp.ne.s32.totalorder %s142, %s156
    %p158 = scmp.eq.s32.totalorder %s22, 0
    %p159 = por %p157, %p158
    %s161 = sadd.s32 %s160, 1
    %p164 = scmp.eq.s32.totalorder %s16, 1
    %p165 = scmp.ne.s32.totalorder %s160, %s162
    %p166 = scmp.eq.s32.totalorder %s16, 0
    %p167 = por %p165, %p166
    %p168 = scmp.ne.s32.totalorder %s160, %s162
    %p169 = scmp.eq.s32.totalorder %s21, 1
    %p170 = por %p168, %p169
    %p171 = scmp.ne.s32.totalorder %s162, %s163
    %p172 = scmp.eq.s32.totalorder %s21, 0
    %p173 = por %p171, %p172
    %p174 = scmp.ne.s32.totalorder %s162, %s163
    %p175 = scmp.eq.s32.totalorder %s22, 1
    %p176 = por %p174, %p175
    %p178 = scmp.ne.s32.totalorder %s163, %s177
    %p179 = scmp.eq.s32.totalorder %s22, 0
    %p180 = por %p178, %p179
    %s182 = sadd.s32 %s181, 1
    %p185 = scmp.eq.s32.totalorder %s16, 1
    %p186 = scmp.ne.s32.totalorder %s181, %s183
    %p187 = scmp.eq.s32.totalorder %s16, 0
    %p188 = por %p186, %p187
    %p189 = scmp.ne.s32.totalorder %s181, %s183
    %p190 = scmp.eq.s32.totalorder %s21, 1
    %p191 = por %p189, %p190
    %p192 = scmp.ne.s32.totalorder %s183, %s184
    %p193 = scmp.eq.s32.totalorder %s21, 0
    %p194 = por %p192, %p193
    %p195 = scmp.ne.s32.totalorder %s183, %s184
    %p196 = scmp.eq.s32.totalorder %s22, 1
    %p197 = por %p195, %p196
    %p199 = scmp.ne.s32.totalorder %s184, %s198
    %p200 = scmp.eq.s32.totalorder %s22, 0
    %p201 = por %p199, %p200
    %s203 = sadd.s32 %s202, 1
    %p206 = scmp.eq.s32.totalorder %s16, 1
    %p207 = scmp.ne.s32.totalorder %s202, %s204
    %p208 = scmp.eq.s32.totalorder %s16, 0
    %p209 = por %p207, %p208
    %p210 = scmp.ne.s32.totalorder %s202, %s204
    %p211 = scmp.eq.s32.totalorder %s21, 1
    %p212 = por %p210, %p211
    %p213 = scmp.ne.s32.totalorder %s204, %s205
    %p214 = scmp.eq.s32.totalorder %s21, 0
    %p215 = por %p213, %p214
    %p216 = scmp.ne.s32.totalorder %s204, %s205
    %p217 = scmp.eq.s32.totalorder %s22, 1
    %p218 = por %p216, %p217
    %p220 = scmp.ne.s32.totalorder %s205, %s219
    %p221 = scmp.eq.s32.totalorder %s22, 0
    %p222 = por %p220, %p221
    %s224 = sadd.s32 %s223, 1
    %p227 = scmp.eq.s32.totalorder %s16, 1
    %p228 = scmp.ne.s32.totalorder %s223, %s225
    %p229 = scmp.eq.s32.totalorder %s16, 0
    %p230 = por %p228, %p229
    %p231 = scmp.ne.s32.totalorder %s223, %s225
    %p232 = scmp.eq.s32.totalorder %s21, 1
    %p233 = por %p231, %p232
    %p234 = scmp.ne.s32.totalorder %s225, %s226
    %p235 = scmp.eq.s32.totalorder %s21, 0
    %p236 = por %p234, %p235
    %p237 = scmp.ne.s32.totalorder %s225, %s226
    %p238 = scmp.eq.s32.totalorder %s22, 1
    %p239 = por %p237, %p238
    %p241 = scmp.ne.s32.totalorder %s226, %s240
    %p242 = scmp.eq.s32.totalorder %s22, 0
    %p243 = por %p241, %p242
    %s244 = ssub.s32 %s16, %s23
    %p245 = scmp.eq.s32.totalorder %s244, 0
    %s247 = sadd.s32 %s246, 1
    %s248 = scalar_select %p245, %s246, %s247
    %p251 = pneg %p245
    %p252 = scmp.eq.s32.totalorder %s16, 1
    %p253 = por %p251, %p252
    %p254 = scmp.ne.s32.totalorder %s246, %s249
    %p255 = scmp.eq.s32.totalorder %s16, 0
    %p256 = por %p254, %p255
    %p257 = scmp.ne.s32.totalorder %s246, %s249
    %p258 = scmp.eq.s32.totalorder %s21, 1
    %p259 = por %p257, %p258
    %p260 = scmp.ne.s32.totalorder %s249, %s250
    %p261 = scmp.eq.s32.totalorder %s21, 0
    %p262 = por %p260, %p261
    %p263 = scmp.ne.s32.totalorder %s249, %s250
    %p264 = scmp.eq.s32.totalorder %s22, 1
    %p265 = por %p263, %p264
    %p267 = scmp.ne.s32.totalorder %s250, %s266
    %p268 = scmp.eq.s32.totalorder %s22, 0
    %p269 = por %p267, %p268
    %p270 = scmp.le.s32.totalorder 1, %s16
    %p271 = scmp.lt.s32.totalorder %s16, 3
    %p272 = pnand %p270, %p271
    %p273 = pneg %p272
    // Predicated region
    $region9: #{tpu_custom_call.1} parent=5 // pred_check
      _
    $region10: #{tpu_custom_call.1} parent=5 // pred_check_branch
      %275 = sbr.rel (%p272) target = $region12
    $region11: #{tpu_custom_call.1} parent=5 // pred_region
      %s276 = ssub.s32 %s16, 1
      // Predicated region
      $region13: #{tpu_custom_call.1} parent=11 // pred_check
        %p277 = pneg %p89
      $region14: #{tpu_custom_call.1} parent=11 // pred_check_branch
        %279 = sbr.rel (%p277) target = $region16
      $region15: #{tpu_custom_call.1} parent=11 // pred_region
        _
      $region16: #{tpu_custom_call.1} parent=11 // pred_fallthru
        _
      // Predicated region
      $region17: #{tpu_custom_call.1} parent=11 // pred_check
        %p280 = pneg %p110
      $region18: #{tpu_custom_call.1} parent=11 // pred_check_branch
        %282 = sbr.rel (%p280) target = $region20
      $region19: #{tpu_custom_call.1} parent=11 // pred_region
        _
      $region20: #{tpu_custom_call.1} parent=11 // pred_fallthru
        _
      // Predicated region
      $region21: #{tpu_custom_call.1} parent=11 // pred_check
        %p283 = pneg %p131
      $region22: #{tpu_custom_call.1} parent=11 // pred_check_branch
        %285 = sbr.rel (%p283) target = $region24
      $region23: #{tpu_custom_call.1} parent=11 // pred_region
        _
      $region24: #{tpu_custom_call.1} parent=11 // pred_fallthru
        _
      // Predicated region
      $region25: #{tpu_custom_call.1} parent=11 // pred_check
        %p286 = pneg %p152
      $region26: #{tpu_custom_call.1} parent=11 // pred_check_branch
        %288 = sbr.rel (%p286) target = $region28
      $region27: #{tpu_custom_call.1} parent=11 // pred_region
        _
      $region28: #{tpu_custom_call.1} parent=11 // pred_fallthru
        _
      // Predicated region
      $region29: #{tpu_custom_call.1} parent=11 // pred_check
        %p289 = pneg %p173
      $region30: #{tpu_custom_call.1} parent=11 // pred_check_branch
        %291 = sbr.rel (%p289) target = $region32
      $region31: #{tpu_custom_call.1} parent=11 // pred_region
        _
      $region32: #{tpu_custom_call.1} parent=11 // pred_fallthru
        _
      // Predicated region
      $region33: #{tpu_custom_call.1} parent=11 // pred_check
        %p292 = pneg %p194
      $region34: #{tpu_custom_call.1} parent=11 // pred_check_branch
        %294 = sbr.rel (%p292) target = $region36
      $region35: #{tpu_custom_call.1} parent=11 // pred_region
        _
      $region36: #{tpu_custom_call.1} parent=11 // pred_fallthru
        _
      // Predicated region
      $region37: #{tpu_custom_call.1} parent=11 // pred_check
        %p295 = pneg %p215
      $region38: #{tpu_custom_call.1} parent=11 // pred_check_branch
        %297 = sbr.rel (%p295) target = $region40
      $region39: #{tpu_custom_call.1} parent=11 // pred_region
        _
      $region40: #{tpu_custom_call.1} parent=11 // pred_fallthru
        _
      // Predicated region
      $region41: #{tpu_custom_call.1} parent=11 // pred_check
        %p298 = pneg %p236
      $region42: #{tpu_custom_call.1} parent=11 // pred_check_branch
        %300 = sbr.rel (%p298) target = $region44
      $region43: #{tpu_custom_call.1} parent=11 // pred_region
        _
      $region44: #{tpu_custom_call.1} parent=11 // pred_fallthru
        _
    $region12: #{tpu_custom_call.1} parent=5 // pred_fallthru
      _
    %p301 = scmp.lt.s32.totalorder %s16, 2
    // Predicated region
    $region45: #{tpu_custom_call.1} parent=5 // pred_check
      %p302 = pneg %p301
    $region46: #{tpu_custom_call.1} parent=5 // pred_check_branch
      %304 = sbr.rel (%p302) target = $region48
    $region47: #{tpu_custom_call.1} parent=5 // pred_region
      // Predicated region
      $region49: #{tpu_custom_call.1} parent=47 // pred_check
        %p305 = pneg %p36
      $region50: #{tpu_custom_call.1} parent=47 // pred_check_branch
        %307 = sbr.rel (%p305) target = $region52
      $region51: #{tpu_custom_call.1} parent=47 // pred_region
        %s308 = smul.u32 4, %s16
        %p309 = scmp.lt.s32.totalorder %s308, 7
        %s310 = scalar_select %p309, %s308, 7
        %s311 = smul.addr %s310, 8
        %s312 = scalar_lea.vmem %s0, %s311
        %s313 = smul.u32 4, %s16
      $region52: #{tpu_custom_call.1} parent=47 // pred_fallthru
        _
      // Predicated region
      $region53: #{tpu_custom_call.1} parent=47 // pred_check
        %p314 = pneg %p62
      $region54: #{tpu_custom_call.1} parent=47 // pred_check_branch
        %316 = sbr.rel (%p314) target = $region56
      $region55: #{tpu_custom_call.1} parent=47 // pred_region
        %s317 = smul.u32 4, %s16
        %p318 = scmp.lt.s32.totalorder %s317, 7
        %s319 = scalar_select %p318, %s317, 7
        %s320 = smul.addr %s319, 8
        %s321 = scalar_lea.vmem %s1, %s320
        %s322 = smul.u32 4, %s16
      $region56: #{tpu_custom_call.1} parent=47 // pred_fallthru
        _
    $region48: #{tpu_custom_call.1} parent=5 // pred_fallthru
      _
    %p323 = scmp.le.s32.totalorder 1, %s16
    %p324 = scmp.lt.s32.totalorder %s16, 3
    %p325 = pnand %p323, %p324
    %p326 = pneg %p325
    // Predicated region
    $region57: #{tpu_custom_call.1} parent=5 // pred_check
      _
    $region58: #{tpu_custom_call.1} parent=5 // pred_check_branch
      %328 = sbr.rel (%p325) target = $region60
    $region59: #{tpu_custom_call.1} parent=5 // pred_region
      %s329 = ssub.s32 %s16, 1
      %s330 = smul.u32 4, %s21
      %p331 = scmp.lt.s32.totalorder %s330, 7
      %s332 = scalar_select %p331, %s330, 7
      %s333 = smul.addr %s332, 8
      %s334 = scalar_lea.vmem %s0, %s333
      %p335 = pneg %p42
      %p336 = pneg %p39
      %s337 = smul.u32 4, %s21
      %p338 = scmp.lt.s32.totalorder %s337, 7
      %s339 = scalar_select %p338, %s337, 7
      %s340 = smul.addr %s339, 8
      %s341 = scalar_lea.vmem %s1, %s340
      %p342 = pneg %p68
      %p343 = pneg %p65
      %p344 = pneg %p89
      %p345 = pneg %p86
      %p346 = pneg %p110
      %p347 = pneg %p107
      %p348 = pneg %p131
      %p349 = pneg %p128
      %p350 = pneg %p152
      %p351 = pneg %p149
      %p352 = pneg %p173
      %p353 = pneg %p170
      %p354 = pneg %p194
      %p355 = pneg %p191
      %p356 = pneg %p215
      %p357 = pneg %p212
      %p358 = pneg %p236
      %p359 = pneg %p233
      %p360 = pneg %p262
      %p361 = pneg %p259
      %s362 = smul.u32 4, %s21
      %p363 = scmp.lt.s32.totalorder %s362, 7
      %s364 = scalar_select %p363, %s362, 7
      %s365 = smul.addr %s364, 8
      %s366 = scalar_lea.vmem %s10, %s365
      %s367 = smul.u32 4, %s21
      %p368 = scmp.lt.s32.totalorder %s367, 7
      %s369 = scalar_select %p368, %s367, 7
      %s370 = smul.addr %s369, 8
      %s371 = scalar_lea.vmem %s0, %s370
      %s372 = smul.u32 4, %s21
      %s373 = smul.u32 4, %s21
      %p374 = scmp.lt.s32.totalorder %s373, 7
      %s375 = scalar_select %p374, %s373, 7
      %s376 = smul.addr %s375, 8
      %s377 = scalar_lea.vmem %s1, %s376
      %s378 = smul.u32 4, %s21
      %s379 = smul.u32 4, %s21
      %p380 = scmp.lt.s32.totalorder %s379, 7
      %s381 = scalar_select %p380, %s379, 7
      %s382 = smul.addr %s381, 8
      %s383 = scalar_lea.vmem %s10, %s382
      %s384 = smul.u32 4, %s21
      %v386 = vld [vmem:[%s371] sm:$0xff]
      %v387 = vld [vmem:[%s371 + $0x8] sm:$0xff]
      %v388 = vld [vmem:[%s371 + $0x10] sm:$0xff]
      %v389 = vld [vmem:[%s371 + $0x18] sm:$0xff]
      %v390 = vpack.c.bf16 %v387, %v386
      %v391 = vpack.c.bf16 %v389, %v388
      %v392 = vld [vmem:[%s2] sm:$0xf]
      %v393 = vld [vmem:[%s2 + $0x4] sm:$0xf]
      %v394 = vld [vmem:[%s377] sm:$0xff]
      %v395 = vld [vmem:[%s377 + $0x8] sm:$0xff]
      %v396 = vld [vmem:[%s377 + $0x10] sm:$0xff]
      %v397 = vld [vmem:[%s377 + $0x18] sm:$0xff]
      %v398 = vpack.c.bf16 %v395, %v394
      %v399 = vpack.c.bf16 %v397, %v396
      %v400 = vld [vmem:[%s3] sm:$0x7]
      %vm401 = vcmask 48128
      %v403 = vsel %vm401, %v398, 0
      %v406 = vsel %vm401, %v399, 0
      %vm408 = vcmask 1042432
      %v410 = vsel %vm408, %v400, 0
      %412 = vmatpush.bf16.msra.mxu0 0
      %413 = vmatpush.bf16.msra.mxu0 0
      %414 = vmatpush.bf16.msra.mxu0 0
      %415 = vmatpush.bf16.msra.mxu0 0
      %416 = vmatpush.bf16.msra.mxu0 0
      %417 = vmatpush.bf16.msra.mxu0 0
      %418 = vmatpush.bf16.msra.mxu0 0
      %419 = vmatpush.bf16.msra.mxu0 %v410
      %420 = vmatmul.bf16.gmra.mxu0 %v403
      %v421 = vpop.f32.mrf.mxu0
      %v422 = vadd.f32 0.0, %v421
      %v423 = vpop.f32.mrf.mxu0
      %v424 = vadd.f32 0.0, %v423
      %425 = vmatmul.bf16.gmra.mxu0 %v406
      %v426 = vpop.f32.mrf.mxu0
      %v427 = vadd.f32 0.0, %v426
      %v428 = vpop.f32.mrf.mxu0
      %v429 = vadd.f32 0.0, %v428
      %430 = vdwg.mxu0
      %v433 = vunpack.c.l.b16 %v392
      %v434 = vunpack.c.l.b16 %v393
      %v435 = vpack.c.b16 %v434, %v433
      %vm437 = vcmask 130048
      %v439 = vsel %vm437, %v390, 0
      %v442 = vsel %vm437, %v391, 0
      %444 = vmatpush.bf16.msra.mxu0 0
      %445 = vmatpush.bf16.msra.mxu0 0
      %446 = vmatpush.bf16.msra.mxu0 0
      %447 = vmatpush.bf16.msra.mxu0 0
      %448 = vmatpush.bf16.msra.mxu0 0
      %449 = vmatpush.bf16.msra.mxu0 0
      %450 = vmatpush.bf16.msra.mxu0 0
      %451 = vmatpush.bf16.msra.mxu0 %v435
      %452 = vmatmul.bf16.gmra.mxu0 %v439
      %v453 = vpop.f32.mrf.mxu0
      %v454 = vadd.f32 %v422, %v453
      %v455 = vpop.f32.mrf.mxu0
      %v456 = vadd.f32 %v424, %v455
      %457 = vmatmul.bf16.gmra.mxu0 %v442
      %v458 = vpop.f32.mrf.mxu0
      %v459 = vadd.f32 %v427, %v458
      %v460 = vpop.f32.mrf.mxu0
      %v461 = vadd.f32 %v429, %v460
      %462 = vdwg.mxu0
      %s463 = smul.u32 %s21, 32
      %v464 = vlaneseq
      %v465 = vshrl.u32 %v464, 7
      %v466 = vadd.s32 %v465, 8
      %v467 = vadd.s32 %v465, 16
      %v468 = vadd.s32 %v465, 24
      %v469 = vlaneseq
      %v470 = vand.u32 %v469, 127
      %v471 = vstv %s463
      %v472 = vadd.s32 %v471, %v465
      %v473 = vadd.s32 %v471, %v466
      %v474 = vadd.s32 %v471, %v467
      %v475 = vadd.s32 %v471, %v468
      %vm476 = vcmp.lt.s32.totalorder %v472, 0
      %v477 = vsub.s32 0, %v472
      %v478 = vsel %vm476, %v477, %v472
      %v479 = vshrl.u32 %v478, 2
      %v480 = vand.u32 %v478, 3
      %v481 = vsub.s32 0, %v480
      %v482 = vsel %vm476, %v481, %v480
      %vm483 = vcmp.lt.s32.totalorder %v473, 0
      %v484 = vsub.s32 0, %v473
      %v485 = vsel %vm483, %v484, %v473
      %v486 = vshrl.u32 %v485, 2
      %v487 = vand.u32 %v485, 3
      %v488 = vsub.s32 0, %v487
      %v489 = vsel %vm483, %v488, %v487
      %vm490 = vcmp.lt.s32.totalorder %v474, 0
      %v491 = vsub.s32 0, %v474
      %v492 = vsel %vm490, %v491, %v474
      %v493 = vshrl.u32 %v492, 2
      %v494 = vand.u32 %v492, 3
      %v495 = vsub.s32 0, %v494
      %v496 = vsel %vm490, %v495, %v494
      %vm497 = vcmp.lt.s32.totalorder %v475, 0
      %v498 = vsub.s32 0, %v475
      %v499 = vsel %vm497, %v498, %v475
      %v500 = vshrl.u32 %v499, 2
      %v501 = vand.u32 %v499, 3
      %v502 = vsub.s32 0, %v501
      %v503 = vsel %vm497, %v502, %v501
      %vm504 = vcmp.ne.s32.totalorder %v482, 0
      %vm505 = vcmp.ne.s32.totalorder %v489, 0
      %vm506 = vcmp.ne.s32.totalorder %v496, 0
      %vm507 = vcmp.ne.s32.totalorder %v503, 0
      %vm508 = vcmp.lt.s32.totalorder %v482, 0
      %vm509 = vcmp.lt.s32.totalorder %v489, 0
      %vm510 = vcmp.lt.s32.totalorder %v496, 0
      %vm511 = vcmp.lt.s32.totalorder %v503, 0
      %vm512 = vmand %vm508, %vm504
      %vm513 = vmand %vm509, %vm505
      %vm514 = vmand %vm510, %vm506
      %vm515 = vmand %vm511, %vm507
      %v516 = vadd.s32 %v482, 4
      %v517 = vadd.s32 %v489, 4
      %v518 = vadd.s32 %v496, 4
      %v519 = vadd.s32 %v503, 4
      %v520 = vsel %vm512, %v516, %v482
      %v521 = vsel %vm513, %v517, %v489
      %v522 = vsel %vm514, %v518, %v496
      %v523 = vsel %vm515, %v519, %v503
      %vm524 = vcmp.eq.s32.totalorder %v520, %v470
      %vm525 = vcmp.eq.s32.totalorder %v521, %v470
      %vm526 = vcmp.eq.s32.totalorder %v522, %v470
      %vm527 = vcmp.eq.s32.totalorder %v523, %v470
      %v528 = vsel %vm524, 1, 0
      %v529 = vsel %vm525, 1, 0
      %v530 = vsel %vm526, 1, 0
      %v531 = vsel %vm527, 1, 0
      %v532 = vcvt.s32.f32 %v528
      %v533 = vcvt.s32.f32 %v529
      %v534 = vcvt.s32.f32 %v530
      %v535 = vcvt.s32.f32 %v531
      %v536 = vpack.c.bf16 %v533, %v532
      %v537 = vpack.c.bf16 %v535, %v534
      %v538 = vld [vmem:[%s4] sm:$0x3]
      %vm539 = vcmask 31744
      %v541 = vsel %vm539, %v536, 0
      %v544 = vsel %vm539, %v537, 0
      %vm546 = vcmask 1041408
      %v548 = vsel %vm546, %v538, 0
      %550 = vmatpush.bf16.msra.mxu0 0
      %551 = vmatpush.bf16.msra.mxu0 0
      %552 = vmatpush.bf16.msra.mxu0 0
      %553 = vmatpush.bf16.msra.mxu0 0
      %554 = vmatpush.bf16.msra.mxu0 0
      %555 = vmatpush.bf16.msra.mxu0 0
      %556 = vmatpush.bf16.msra.mxu0 0
      %557 = vmatpush.bf16.msra.mxu0 %v548
      %558 = vmatmul.bf16.gmra.mxu0 %v541
      %v559 = vpop.f32.mrf.mxu0
      %v560 = vadd.f32 0.0, %v559
      %v561 = vpop.f32.mrf.mxu0
      %v562 = vadd.f32 0.0, %v561
      %563 = vmatmul.bf16.gmra.mxu0 %v544
      %v564 = vpop.f32.mrf.mxu0
      %v565 = vadd.f32 0.0, %v564
      %v566 = vpop.f32.mrf.mxu0
      %v567 = vadd.f32 0.0, %v566
      %568 = vdwg.mxu0
      %v569 = vadd.f32 %v454, %v560
      %v570 = vadd.f32 %v456, %v562
      %v571 = vadd.f32 %v459, %v565
      %v572 = vadd.f32 %v461, %v567
      %v573 = vld [vmem:[%s5] sm:$0x1]
      %v575 = vperm.slane %v573, 0
      %v577 = vadd.f32 %v569, %v575
      %v578 = vadd.f32 %v570, %v575
      %v579 = vadd.f32 %v571, %v575
      %v580 = vadd.f32 %v572, %v575
      %v581 = vmax.f32 %v577, 0.0
      %v582 = vmax.f32 %v578, 0.0
      %v583 = vmax.f32 %v579, 0.0
      %v584 = vmax.f32 %v580, 0.0
      %v585 = vpack.c.bf16 %v582, %v581
      %v586 = vpack.c.bf16 %v584, %v583
      %v587 = vld [vmem:[%s6] sm:$0xf]
      %v588 = vld [vmem:[%s6 + $0x4] sm:$0xf]
      %v589 = vld [vmem:[%s6 + $0x8] sm:$0xf]
      %v590 = vld [vmem:[%s6 + $0xc] sm:$0xf]
      %v591 = vld [vmem:[%s6 + $0x10] sm:$0xf]
      %v592 = vld [vmem:[%s6 + $0x14] sm:$0xf]
      %v593 = vld [vmem:[%s6 + $0x18] sm:$0xf]
      %v594 = vld [vmem:[%s6 + $0x1c] sm:$0xf]
      %v595 = vld [vmem:[%s6 + $0x20] sm:$0xf]
      %v596 = vld [vmem:[%s6 + $0x24] sm:$0xf]
      %v597 = vld [vmem:[%s6 + $0x28] sm:$0xf]
      %v598 = vld [vmem:[%s6 + $0x2c] sm:$0xf]
      %v599 = vld [vmem:[%s6 + $0x30] sm:$0xf]
      %v600 = vld [vmem:[%s6 + $0x34] sm:$0xf]
      %v601 = vld [vmem:[%s6 + $0x38] sm:$0xf]
      %v602 = vld [vmem:[%s6 + $0x3c] sm:$0xf]
      %v603 = vld [vmem:[%s7] sm:$0x1]
      %v605 = vperm.slane %v603, 0
      %v623 = vunpack.c.l.b16 %v587
      %v624 = vunpack.c.l.b16 %v588
      %v625 = vunpack.c.l.b16 %v589
      %v626 = vunpack.c.l.b16 %v590
      %v627 = vunpack.c.l.b16 %v591
      %v628 = vunpack.c.l.b16 %v592
      %v629 = vunpack.c.l.b16 %v593
      %v630 = vunpack.c.l.b16 %v594
      %v631 = vunpack.c.l.b16 %v595
      %v632 = vunpack.c.l.b16 %v596
      %v633 = vunpack.c.l.b16 %v597
      %v634 = vunpack.c.l.b16 %v598
      %v635 = vunpack.c.l.b16 %v599
      %v636 = vunpack.c.l.b16 %v600
      %v637 = vunpack.c.l.b16 %v601
      %v638 = vunpack.c.l.b16 %v602
      %v639 = vpack.c.b16 %v624, %v623
      %v640 = vpack.c.b16 %v626, %v625
      %v641 = vpack.c.b16 %v628, %v627
      %v642 = vpack.c.b16 %v630, %v629
      %v643 = vpack.c.b16 %v632, %v631
      %v644 = vpack.c.b16 %v634, %v633
      %v645 = vpack.c.b16 %v636, %v635
      %v646 = vpack.c.b16 %v638, %v637
      %655 = vmatpush.bf16.msra.mxu0 %v646
      %656 = vmatpush.bf16.msra.mxu0 %v645
      %657 = vmatpush.bf16.msra.mxu0 %v644
      %658 = vmatpush.bf16.msra.mxu0 %v643
      %659 = vmatpush.bf16.msra.mxu0 %v642
      %660 = vmatpush.bf16.msra.mxu0 %v641
      %661 = vmatpush.bf16.msra.mxu0 %v640
      %662 = vmatpush.bf16.msra.mxu0 %v639
      %663 = vmatmul.bf16.gmra.mxu0 %v585
      %v664 = vpop.f32.mrf.mxu0
      %v665 = vadd.f32 %v605, %v664
      %v666 = vpop.f32.mrf.mxu0
      %v667 = vadd.f32 %v605, %v666
      %668 = vmatmul.bf16.gmra.mxu0 %v586
      %v669 = vpop.f32.mrf.mxu0
      %v670 = vadd.f32 %v605, %v669
      %v671 = vpop.f32.mrf.mxu0
      %v672 = vadd.f32 %v605, %v671
      %673 = vdwg.mxu0
      %v674 = vmax.f32 %v665, 0.0
      %v675 = vmax.f32 %v667, 0.0
      %v676 = vmax.f32 %v670, 0.0
      %v677 = vmax.f32 %v672, 0.0
      %v678 = vpack.c.bf16 %v675, %v674
      %v679 = vpack.c.bf16 %v677, %v676
      %v680 = vld [vmem:[%s8] sm:$0xf]
      %v681 = vld [vmem:[%s8 + $0x4] sm:$0xf]
      %v682 = vld [vmem:[%s8 + $0x8] sm:$0xf]
      %v683 = vld [vmem:[%s8 + $0xc] sm:$0xf]
      %v684 = vld [vmem:[%s8 + $0x10] sm:$0xf]
      %v685 = vld [vmem:[%s8 + $0x14] sm:$0xf]
      %v686 = vld [vmem:[%s8 + $0x18] sm:$0xf]
      %v687 = vld [vmem:[%s8 + $0x1c] sm:$0xf]
      %v688 = vld [vmem:[%s8 + $0x20] sm:$0xf]
      %v689 = vld [vmem:[%s8 + $0x24] sm:$0xf]
      %v690 = vld [vmem:[%s8 + $0x28] sm:$0xf]
      %v691 = vld [vmem:[%s8 + $0x2c] sm:$0xf]
      %v692 = vld [vmem:[%s8 + $0x30] sm:$0xf]
      %v693 = vld [vmem:[%s8 + $0x34] sm:$0xf]
      %v694 = vld [vmem:[%s8 + $0x38] sm:$0xf]
      %v695 = vld [vmem:[%s8 + $0x3c] sm:$0xf]
      %v696 = vld [vmem:[%s9] sm:$0x1]
      %v698 = vperm.slane %v696, 0
      %v716 = vunpack.c.l.b16 %v680
      %v717 = vunpack.c.l.b16 %v681
      %v718 = vunpack.c.l.b16 %v682
      %v719 = vunpack.c.l.b16 %v683
      %v720 = vunpack.c.l.b16 %v684
      %v721 = vunpack.c.l.b16 %v685
      %v722 = vunpack.c.l.b16 %v686
      %v723 = vunpack.c.l.b16 %v687
      %v724 = vunpack.c.l.b16 %v688
      %v725 = vunpack.c.l.b16 %v689
      %v726 = vunpack.c.l.b16 %v690
      %v727 = vunpack.c.l.b16 %v691
      %v728 = vunpack.c.l.b16 %v692
      %v729 = vunpack.c.l.b16 %v693
      %v730 = vunpack.c.l.b16 %v694
      %v731 = vunpack.c.l.b16 %v695
      %v732 = vpack.c.b16 %v717, %v716
      %v733 = vpack.c.b16 %v719, %v718
      %v734 = vpack.c.b16 %v721, %v720
      %v735 = vpack.c.b16 %v723, %v722
      %v736 = vpack.c.b16 %v725, %v724
      %v737 = vpack.c.b16 %v727, %v726
      %v738 = vpack.c.b16 %v729, %v728
      %v739 = vpack.c.b16 %v731, %v730
      %748 = vmatpush.bf16.msra.mxu0 %v739
      %749 = vmatpush.bf16.msra.mxu0 %v738
      %750 = vmatpush.bf16.msra.mxu0 %v737
      %751 = vmatpush.bf16.msra.mxu0 %v736
      %752 = vmatpush.bf16.msra.mxu0 %v735
      %753 = vmatpush.bf16.msra.mxu0 %v734
      %754 = vmatpush.bf16.msra.mxu0 %v733
      %755 = vmatpush.bf16.msra.mxu0 %v732
      %756 = vmatmul.bf16.gmra.mxu0 %v678
      %v757 = vpop.f32.mrf.mxu0
      %v758 = vadd.f32 %v698, %v757
      %v759 = vpop.f32.mrf.mxu0
      %v760 = vadd.f32 %v698, %v759
      %761 = vmatmul.bf16.gmra.mxu0 %v679
      %v762 = vpop.f32.mrf.mxu0
      %v763 = vadd.f32 %v698, %v762
      %v764 = vpop.f32.mrf.mxu0
      %v765 = vadd.f32 %v698, %v764
      %766 = vdwg.mxu0
      %vm767 = vcmask 64512
      %768 = vst.msk [vmem:[%s383] sm:$0xff] %vm767, %v758
      %769 = vst.msk [vmem:[%s383 + $0x8] sm:$0xff] %vm767, %v760
      %770 = vst.msk [vmem:[%s383 + $0x10] sm:$0xff] %vm767, %v763
      %771 = vst.msk [vmem:[%s383 + $0x18] sm:$0xff] %vm767, %v765
      %s772 = smul.u32 4, %s21
      %p773 = scmp.lt.s32.totalorder %s772, 7
      %s774 = scalar_select %p773, %s772, 7
      %s775 = smul.addr %s774, 8
      %s776 = scalar_lea.vmem %s10, %s775
      // Predicated region
      $region61: #{tpu_custom_call.1} parent=59 // pred_check
        %p777 = pneg %p259
      $region62: #{tpu_custom_call.1} parent=59 // pred_check_branch
        %779 = sbr.rel (%p777) target = $region64
      $region63: #{tpu_custom_call.1} parent=59 // pred_region
        %s780 = smul.u32 4, %s21
      $region64: #{tpu_custom_call.1} parent=59 // pred_fallthru
        _
    $region60: #{tpu_custom_call.1} parent=5 // pred_fallthru
      _
    %p781 = scmp.le.s32.totalorder 2, %s16
    // Predicated region
    $region65: #{tpu_custom_call.1} parent=5 // pred_check
      %p782 = pneg %p781
    $region66: #{tpu_custom_call.1} parent=5 // pred_check_branch
      %784 = sbr.rel (%p782) target = $region68
    $region67: #{tpu_custom_call.1} parent=5 // pred_region
      %s785 = ssub.s32 %s16, 2
      // Predicated region
      $region69: #{tpu_custom_call.1} parent=67 // pred_check
        %p786 = pneg %p265
      $region70: #{tpu_custom_call.1} parent=67 // pred_check_branch
        %788 = sbr.rel (%p786) target = $region72
      $region71: #{tpu_custom_call.1} parent=67 // pred_region
        %s789 = smul.u32 4, %s22
        %p790 = scmp.lt.s32.totalorder %s789, 7
        %s791 = scalar_select %p790, %s789, 7
        %s792 = smul.addr %s791, 8
        %s793 = scalar_lea.vmem %s10, %s792
      $region72: #{tpu_custom_call.1} parent=67 // pred_fallthru
        _
    $region68: #{tpu_custom_call.1} parent=5 // pred_fallthru
      _
  $region6: #{tpu_custom_call.1} parent=0 // loop_footer
    %s20 = sadd.s32 1, %s16
  $region7: #{tpu_custom_call.1} parent=0 // loop_footer_branch
    %15 = sbr.rel target = $region3
  $region8: #{tpu_custom_call.1} parent=0 // loop_exit
    _

</llo_original>
